<compile_context>
chip_gen: v7x
topology: tpu7x:2x2x1
jax: 0.10.0
libtpu: 0.0.40
codegen_flags: <defaults>
</compile_context>

<pallas_src>
import functools

import jax
import jax.numpy as jnp
from jax.experimental import pallas as pl
from jax.experimental.pallas import tpu as pltpu


def _lyapunov_kernel(d_z, zT_ref, w2_ref, w3_ref, pk_ref, out_ref):
    dz2 = d_z * d_z
    zT = zT_ref[...]                         # (d_z, TB)   batch on lanes
    pk = pk_ref[...]                         # (F, 4+d_z)  packed small operands
    z_eq = pk[:d_z, 0:1]                     # (d_z, 1)
    b1 = pk[:, 1:2]                          # (F, 1)
    b2 = pk[:, 2:3]                          # (F, 1)
    b3 = pk[:dz2, 3:4]                       # (dz2, 1)

    # ---- layer 1 on the VPU: K = d_z is tiny, the MXU would be wasted ----
    h = jnp.broadcast_to(b1, (b1.shape[0], zT.shape[1]))
    for i in range(d_z):                     # static, d_z iterations
        h = h + pk[:, 4 + i:5 + i] * zT[i:i + 1, :]   # W1[:, i] folded into pk
    h = jnp.tanh(h)                          # (F, TB)

    # ---- layers 2 / 3 on the MXU (weights in (out, in) -> plain W @ H), f32 ----
    h = jnp.tanh(
        jnp.dot(w2_ref[...], h, preferred_element_type=jnp.float32) + b2)     # (F, TB)
    o = jnp.dot(w3_ref[...], h, preferred_element_type=jnp.float32) + b3      # (dz2, TB)

    # ---- quadratic form: Vz = ||z_bar||^2 + ||L^T z_bar||^2 ----
    z_bar = zT - z_eq                                                # (d_z, TB)
    acc = jnp.sum(z_bar * z_bar, axis=0, keepdims=True)             # (1, TB)
    for j in range(d_z):                     # static; full-lane-width rows only
        col = jnp.zeros_like(acc)
        for i in range(d_z):
            # L[b, i, j] == o_rowmajor[b, i*d_z + j] == o[i*d_z + j, b] here
            col = col + o[i * d_z + j:i * d_z + j + 1, :] * z_bar[i:i + 1, :]
        acc = acc + col * col
    out_ref[...] = acc                        # (1, TB) lane-dense store


def _round_up(x, m):
    return ((x + m - 1) // m) * m


def _lyapunov_ellipse_impl(z, z_eq, W1, b1, W2, b2, W3, b3, *, tile_b=4096):
    """z: (B, d_z) or (d_z,). Weights in PyTorch nn.Linear layout (out, in).

    Returns Vz of shape (B,) (or a scalar for 1-D input), float32.
    """
    if z.ndim == 1:
        return _lyapunov_ellipse_impl(z[None, :], z_eq, W1, b1, W2, b2, W3, b3,
                                      tile_b=tile_b)[0]

    B, d_z = z.shape
    F = W1.shape[0]
    dz2 = d_z * d_z
    assert W1.shape == (F, d_z) and W2.shape == (F, F) and W3.shape == (dz2, F)
    assert F >= dz2 and F >= d_z, "packing assumes features >= d_z*d_z"

    # Effective batch tile: big enough to amortize the ~0.35 us/step pipeline
    # overhead, clamped to the (128-aligned) padded batch, and split so the
    # grid keeps >= 2 steps whenever possible (lets the "parallel" axis shard
    # across v7x's two TensorCores; free on v5e/v6e).
    B_pad_min = _round_up(B, 128)
    tile = min(_round_up(max(tile_b, 128), 128), B_pad_min)
    if B_pad_min > 128 and pl.cdiv(B_pad_min, tile) < 2:
        tile = _round_up(pl.cdiv(B_pad_min, 2), 128)
    n_tiles = pl.cdiv(B_pad_min, tile)
    B_pad = n_tiles * tile

    # Pad batch to the tile multiple and transpose to (d_z, B_pad). Under jit
    # this fuses with the kernel launch (no standalone HBM pass).
    zT = jnp.zeros((d_z, B_pad), jnp.float32).at[:, :B].set(
        z.astype(jnp.float32).T)

    # Pack all tiny operands into one array: cols = [z_eq | b1 | b2 | b3 | W1].
    packed = jnp.zeros((F, 4 + d_z), jnp.float32)
    packed = packed.at[:d_z, 0].set(z_eq.astype(jnp.float32))
    packed = packed.at[:, 1].set(b1.astype(jnp.float32))
    packed = packed.at[:, 2].set(b2.astype(jnp.float32))
    packed = packed.at[:dz2, 3].set(b3.astype(jnp.float32))
    packed = packed.at[:, 4:4 + d_z].set(W1.astype(jnp.float32))

    kernel = functools.partial(_lyapunov_kernel, d_z)
    out = pl.pallas_call(
        kernel,
        out_shape=jax.ShapeDtypeStruct((1, B_pad), jnp.float32),
        grid=(n_tiles,),
        in_specs=[
            pl.BlockSpec((d_z, tile), lambda i: (0, i)),       # z^T batch tile
            pl.BlockSpec((F, F), lambda i: (0, 0)),            # W2 (resident)
            pl.BlockSpec((dz2, F), lambda i: (0, 0)),          # W3 (resident)
            pl.BlockSpec((F, 4 + d_z), lambda i: (0, 0)),      # packed z_eq/b/W1
        ],
        out_specs=pl.BlockSpec((1, tile), lambda i: (0, i)),
        compiler_params=pltpu.CompilerParams(
            dimension_semantics=("parallel",)),
    )(zT, W2.astype(jnp.float32), W3.astype(jnp.float32), packed)
    return out[0, :B]


# Public entry point: jitted wrapper (tile_b static) so pad/transpose/pack/slice
# fuse with the Pallas call instead of being separate dispatches.
lyapunov_ellipse = jax.jit(_lyapunov_ellipse_impl, static_argnames=("tile_b",))


def _reference(z, z_eq, W1, b1, W2, b2, W3, b3, d_z):
    # Pure-JAX reference with PyTorch (out, in) weight layout.
    z_bar = z - z_eq[None, :]
    o = jnp.tanh(z @ W1.T + b1)
    o = jnp.tanh(o @ W2.T + b2)
    o = o @ W3.T + b3
    L = o.reshape(-1, d_z, d_z)
    P = L @ jnp.swapaxes(L, 1, 2) + jnp.eye(d_z)[None]
    return jnp.einsum("bi,bij,bj->b", z_bar, P, z_bar)


if __name__ == "__main__":
    # Module hyper-params: n_layers=3, features=32, d_z=2 (first Linear in=2).
    n_layers, F, d_z, B = 3, 32, 2, 200   # B not a multiple of 128: tests padding

    key = jax.random.PRNGKey(0)
    ks = jax.random.split(key, 8)
    # Parameters in native PyTorch nn.Linear layout: W is (out_features, in_features).
    W1 = jax.random.normal(ks[0], (F, d_z), jnp.float32) * 0.5
    b1 = jax.random.normal(ks[1], (F,), jnp.float32) * 0.1
    W2 = jax.random.normal(ks[2], (F, F), jnp.float32) * 0.2
    b2 = jax.random.normal(ks[3], (F,), jnp.float32) * 0.1
    W3 = jax.random.normal(ks[4], (d_z * d_z, F), jnp.float32) * 0.2
    b3 = jax.random.normal(ks[5], (d_z * d_z,), jnp.float32) * 0.1
    z_eq = jax.random.normal(ks[6], (d_z,), jnp.float32)
    z = jax.random.normal(ks[7], (B, d_z), jnp.float32)

    vz = jax.block_until_ready(lyapunov_ellipse(z, z_eq, W1, b1, W2, b2, W3, b3))
    vz_ref = _reference(z, z_eq, W1, b1, W2, b2, W3, b3, d_z)

    assert vz.shape == (B,)
    assert jnp.allclose(vz, vz_ref, atol=1e-4, rtol=1e-4), (vz, vz_ref)

    # Single-sample (z.ndim == 1) path of the original module.
    v1 = jax.block_until_ready(lyapunov_ellipse(z[0], z_eq, W1, b1, W2, b2, W3, b3))
    assert jnp.allclose(v1, vz_ref[0], atol=1e-4, rtol=1e-4), (v1, vz_ref[0])

    # Explicit small-tile override still works (exercises the multi-step grid).
    v_small = jax.block_until_ready(
        lyapunov_ellipse(z, z_eq, W1, b1, W2, b2, W3, b3, tile_b=128))
    assert jnp.allclose(v_small, vz_ref, atol=1e-4, rtol=1e-4)

    print("KERNEL_OK")
</pallas_src>

<mosaic_0001>
module attributes {stable_mosaic.version = 11 : i64} {
  func.func @_lyapunov_kernel(%arg0: i32, %arg1: memref<2x128xf32, #tpu.memory_space<vmem>>, %arg2: memref<32x32xf32, #tpu.memory_space<vmem>>, %arg3: memref<4x32xf32, #tpu.memory_space<vmem>>, %arg4: memref<32x6xf32, #tpu.memory_space<vmem>>, %arg5: memref<1x128xf32, #tpu.memory_space<vmem>>) attributes {dimension_semantics = [#tpu.dimension_semantics<parallel>], iteration_bounds = array<i64: 2>, scalar_prefetch = 0 : i64, scratch_operands = 0 : i64, tpu.core_type = #tpu.core_type<tc>, window_params = [{transform_indices = @transform_0, window_bounds = array<i64: 2, 128>}, {pipeline_mode = #tpu.pipeline_mode<synchronous>, transform_indices = @transform_1, window_bounds = array<i64: 32, 32>}, {pipeline_mode = #tpu.pipeline_mode<synchronous>, transform_indices = @transform_2, window_bounds = array<i64: 4, 32>}, {pipeline_mode = #tpu.pipeline_mode<synchronous>, transform_indices = @transform_3, window_bounds = array<i64: 32, 6>}, {transform_indices = @transform_4, window_bounds = array<i64: 1, 128>}]} {
    %c0 = arith.constant 0 : index
    %c0_0 = arith.constant 0 : index
    %0 = vector.load %arg1[%c0, %c0_0] : memref<2x128xf32, #tpu.memory_space<vmem>>, vector<2x128xf32>
    %c0_1 = arith.constant 0 : index
    %c0_2 = arith.constant 0 : index
    %1 = vector.load %arg4[%c0_1, %c0_2] : memref<32x6xf32, #tpu.memory_space<vmem>>, vector<32x6xf32>
    %2 = vector.extract_strided_slice %1 {offsets = [0, 0], sizes = [2, 1], strides = [1, 1]} : vector<32x6xf32> to vector<2x1xf32>
    %3 = vector.extract_strided_slice %1 {offsets = [0, 1], sizes = [32, 1], strides = [1, 1]} : vector<32x6xf32> to vector<32x1xf32>
    %4 = vector.extract_strided_slice %1 {offsets = [0, 2], sizes = [32, 1], strides = [1, 1]} : vector<32x6xf32> to vector<32x1xf32>
    %5 = vector.extract_strided_slice %1 {offsets = [0, 3], sizes = [4, 1], strides = [1, 1]} : vector<32x6xf32> to vector<4x1xf32>
    %6 = vector.shape_cast %3 : vector<32x1xf32> to vector<32x1xf32>
    %7 = vector.broadcast %6 : vector<32x1xf32> to vector<32x128xf32>
    %8 = vector.extract_strided_slice %1 {offsets = [0, 4], sizes = [32, 1], strides = [1, 1]} : vector<32x6xf32> to vector<32x1xf32>
    %9 = vector.extract_strided_slice %0 {offsets = [0, 0], sizes = [1, 128], strides = [1, 1]} : vector<2x128xf32> to vector<1x128xf32>
    %10 = vector.broadcast %8 : vector<32x1xf32> to vector<32x128xf32>
    %11 = vector.broadcast %9 : vector<1x128xf32> to vector<32x128xf32>
    %12 = arith.mulf %10, %11 : vector<32x128xf32>
    %13 = arith.addf %7, %12 : vector<32x128xf32>
    %14 = vector.extract_strided_slice %1 {offsets = [0, 5], sizes = [32, 1], strides = [1, 1]} : vector<32x6xf32> to vector<32x1xf32>
    %15 = vector.extract_strided_slice %0 {offsets = [1, 0], sizes = [1, 128], strides = [1, 1]} : vector<2x128xf32> to vector<1x128xf32>
    %16 = vector.broadcast %14 : vector<32x1xf32> to vector<32x128xf32>
    %17 = vector.broadcast %15 : vector<1x128xf32> to vector<32x128xf32>
    %18 = arith.mulf %16, %17 : vector<32x128xf32>
    %19 = arith.addf %13, %18 : vector<32x128xf32>
    %20 = math.tanh %19 : vector<32x128xf32>
    %c0_3 = arith.constant 0 : index
    %c0_4 = arith.constant 0 : index
    %21 = vector.load %arg2[%c0_3, %c0_4] : memref<32x32xf32, #tpu.memory_space<vmem>>, vector<32x32xf32>
    %cst = arith.constant dense<0.000000e+00> : vector<32x128xf32>
    %22 = tpu.matmul %21, %20, %cst {dimension_numbers = #tpu.dot_dimension_numbers<[1], [0], [0], [1], [0, 0, 1, 1], [], []>} : vector<32x32xf32>, vector<32x128xf32>, vector<32x128xf32> -> vector<32x128xf32>
    %23 = vector.broadcast %4 : vector<32x1xf32> to vector<32x128xf32>
    %24 = arith.addf %22, %23 : vector<32x128xf32>
    %25 = math.tanh %24 : vector<32x128xf32>
    %c0_5 = arith.constant 0 : index
    %c0_6 = arith.constant 0 : index
    %26 = vector.load %arg3[%c0_5, %c0_6] : memref<4x32xf32, #tpu.memory_space<vmem>>, vector<4x32xf32>
    %cst_7 = arith.constant dense<0.000000e+00> : vector<4x128xf32>
    %27 = tpu.matmul %26, %25, %cst_7 {dimension_numbers = #tpu.dot_dimension_numbers<[1], [0], [0], [1], [0, 0, 1, 1], [], []>} : vector<4x32xf32>, vector<32x128xf32>, vector<4x128xf32> -> vector<4x128xf32>
    %28 = vector.broadcast %5 : vector<4x1xf32> to vector<4x128xf32>
    %29 = arith.addf %27, %28 : vector<4x128xf32>
    %30 = vector.broadcast %2 : vector<2x1xf32> to vector<2x128xf32>
    %31 = arith.subf %0, %30 : vector<2x128xf32>
    %32 = arith.mulf %31, %31 : vector<2x128xf32>
    %cst_8 = arith.constant dense<0.000000e+00> : vector<128xf32>
    %33 = vector.multi_reduction <add>, %32, %cst_8 [0] : vector<2x128xf32> to vector<128xf32>
    %34 = vector.shape_cast %33 : vector<128xf32> to vector<1x128xf32>
    %cst_9 = arith.constant 0.000000e+00 : f32
    %35 = vector.broadcast %cst_9 : f32 to vector<1x128xf32>
    %36 = vector.extract_strided_slice %29 {offsets = [0, 0], sizes = [1, 128], strides = [1, 1]} : vector<4x128xf32> to vector<1x128xf32>
    %37 = vector.extract_strided_slice %31 {offsets = [0, 0], sizes = [1, 128], strides = [1, 1]} : vector<2x128xf32> to vector<1x128xf32>
    %38 = arith.mulf %36, %37 : vector<1x128xf32>
    %39 = arith.addf %35, %38 : vector<1x128xf32>
    %40 = vector.extract_strided_slice %29 {offsets = [2, 0], sizes = [1, 128], strides = [1, 1]} : vector<4x128xf32> to vector<1x128xf32>
    %41 = vector.extract_strided_slice %31 {offsets = [1, 0], sizes = [1, 128], strides = [1, 1]} : vector<2x128xf32> to vector<1x128xf32>
    %42 = arith.mulf %40, %41 : vector<1x128xf32>
    %43 = arith.addf %39, %42 : vector<1x128xf32>
    %44 = arith.mulf %43, %43 : vector<1x128xf32>
    %45 = arith.addf %34, %44 : vector<1x128xf32>
    %cst_10 = arith.constant 0.000000e+00 : f32
    %46 = vector.broadcast %cst_10 : f32 to vector<1x128xf32>
    %47 = vector.extract_strided_slice %29 {offsets = [1, 0], sizes = [1, 128], strides = [1, 1]} : vector<4x128xf32> to vector<1x128xf32>
    %48 = vector.extract_strided_slice %31 {offsets = [0, 0], sizes = [1, 128], strides = [1, 1]} : vector<2x128xf32> to vector<1x128xf32>
    %49 = arith.mulf %47, %48 : vector<1x128xf32>
    %50 = arith.addf %46, %49 : vector<1x128xf32>
    %51 = vector.extract_strided_slice %29 {offsets = [3, 0], sizes = [1, 128], strides = [1, 1]} : vector<4x128xf32> to vector<1x128xf32>
    %52 = vector.extract_strided_slice %31 {offsets = [1, 0], sizes = [1, 128], strides = [1, 1]} : vector<2x128xf32> to vector<1x128xf32>
    %53 = arith.mulf %51, %52 : vector<1x128xf32>
    %54 = arith.addf %50, %53 : vector<1x128xf32>
    %55 = arith.mulf %54, %54 : vector<1x128xf32>
    %56 = arith.addf %45, %55 : vector<1x128xf32>
    %c0_11 = arith.constant 0 : index
    %c0_12 = arith.constant 0 : index
    %57 = vector.load %arg5[%c0_11, %c0_12] : memref<1x128xf32, #tpu.memory_space<vmem>>, vector<1x128xf32>
    tpu.vector_store %arg5[%c0_11, %c0_12], %56 {strides = array<i32>} : memref<1x128xf32, #tpu.memory_space<vmem>>, vector<1x128xf32>,
    return
  }
  func.func @transform_0(%arg0: i32) -> (i32, i32) {
    %c0_i32 = arith.constant 0 : i32
    %c0_i32_0 = arith.constant 0 : i32
    return %c0_i32, %arg0 : i32, i32
  }
  func.func @transform_1(%arg0: i32) -> (i32, i32) {
    %c0_i32 = arith.constant 0 : i32
    %c0_i32_0 = arith.constant 0 : i32
    %c0_i32_1 = arith.constant 0 : i32
    return %c0_i32, %c0_i32_0 : i32, i32
  }
  func.func @transform_2(%arg0: i32) -> (i32, i32) {
    %c0_i32 = arith.constant 0 : i32
    %c0_i32_0 = arith.constant 0 : i32
    %c0_i32_1 = arith.constant 0 : i32
    return %c0_i32, %c0_i32_0 : i32, i32
  }
  func.func @transform_3(%arg0: i32) -> (i32, i32) {
    %c0_i32 = arith.constant 0 : i32
    %c0_i32_0 = arith.constant 0 : i32
    %c0_i32_1 = arith.constant 0 : i32
    return %c0_i32, %c0_i32_0 : i32, i32
  }
  func.func @transform_4(%arg0: i32) -> (i32, i32) {
    %c0_i32 = arith.constant 0 : i32
    %c0_i32_0 = arith.constant 0 : i32
    return %c0_i32, %arg0 : i32, i32
  }
}

</mosaic_0001>

<llo_original>
// kernel: _lyapunov_ellipse_impl.1
$region0: #{_lyapunov_ellipse_impl.1}
  #allocation0 [shape = 'u32[]', space=smem, size = 0x4, offset = 0x4, fixed_abs, tag = 'smem constant byte address 0x4 - core index']
  #allocation1 [shape = 'u32[144,128]{1,0:T(1,128)}', space=vmem, size = 0x12000, scoped, tag = 'internal scratch']
  %s0 = inlined_call_operand.vmem [shape: f32[2,256], index: 0, kind: input, shape index: {}]
  %s1 = inlined_call_operand.vmem [shape: f32[32,32], index: 1, kind: input, shape index: {}]
  %s2 = inlined_call_operand.vmem [shape: f32[4,32], index: 2, kind: input, shape index: {}]
  %s3 = inlined_call_operand.vmem [shape: f32[32,6], index: 3, kind: input, shape index: {}]
  %s4 = inlined_call_operand.hbm [shape: f32[1,256], index: 4, kind: output, shape index: {}]
  %s5 = sld [smem:[#allocation0]]
  $region49: #{_lyapunov_ellipse_impl.1} parent=0
    _
  %s7 = ssub.s32 1, %s5
  %s8 = scalar_select 0, %s7, %s5
  $region1: #{_lyapunov_ellipse_impl.1} parent=0
    #allocation2 [shape = 'u8[1024]{0}', space=vmem, size = 0x400, scoped, tag = 'output window, operand 0']
    #allocation3 [shape = 's32[2]{0}', space=sflag, size = 0x8, scoped, tag = 'scoped memory for _lyapunov_ellipse_impl.1']
    %9 = vsyncpa [#allocation3], 0
    %s10 = scalar_lea.sflag [#allocation3], 1
    %11 = vsyncpa %s10, 0
    loop: start=0, step=1, limit=4
    $region2: #{_lyapunov_ellipse_impl.1} parent=1 // loop_pre_header
      _
    $region3: #{_lyapunov_ellipse_impl.1} parent=1 // loop_header
      %s13 = sphi 0, %s17
      %p14 = scmp.ge.s32.totalorder %s13, 4
      %s23 = sphi 0, %s25
      %s26 = sphi 0, %s23
      %s27 = sphi 0, %s26
      %s43 = sphi 0, %s27
      %s47 = sphi 0, %s47
      %s49 = sphi 0, %s47
      %s50 = sphi 0, %s49
      %s64 = sphi 0, %s50
      %s68 = sphi 0, %s68
      %s70 = sphi 0, %s68
      %s71 = sphi 0, %s70
      %s85 = sphi 0, %s71
      %s89 = sphi 0, %s89
      %s91 = sphi 0, %s89
      %s92 = sphi 0, %s91
      %s106 = sphi 0, %s92
      %s112 = sphi 0, %s114
      %s115 = sphi 0, %s112
      %s116 = sphi 0, %s115
      %s132 = sphi 0, %s116
    $region4: #{_lyapunov_ellipse_impl.1} parent=1 // loop_header_branch
      %16 = sbr.rel (%p14) target = $region8
    $region5: #{_lyapunov_ellipse_impl.1} parent=1 // loop_body
      %s18 = ssub.s32 %s13, 1
      %s19 = ssub.s32 %s13, 2
      %s20 = sadd.s32 %s13, 1
      %s21 = ssub.s32 %s13, %s20
      %p22 = scmp.eq.s32.totalorder %s21, 0
      %s24 = sadd.s32 %s23, 1
      %s25 = scalar_select %p22, %s23, %s24
      %p28 = pneg %p22
      %p29 = scmp.eq.s32.totalorder %s13, 1
      %p30 = por %p28, %p29
      %p31 = scmp.ne.s32.totalorder %s23, %s26
      %p32 = scmp.eq.s32.totalorder %s13, 0
      %p33 = por %p31, %p32
      %p34 = scmp.ne.s32.totalorder %s23, %s26
      %p35 = scmp.eq.s32.totalorder %s18, 1
      %p36 = por %p34, %p35
      %p37 = scmp.ne.s32.totalorder %s26, %s27
      %p38 = scmp.eq.s32.totalorder %s18, 0
      %p39 = por %p37, %p38
      %p40 = scmp.ne.s32.totalorder %s26, %s27
      %p41 = scmp.eq.s32.totalorder %s19, 1
      %p42 = por %p40, %p41
      %p44 = scmp.ne.s32.totalorder %s27, %s43
      %p45 = scmp.eq.s32.totalorder %s19, 0
      %p46 = por %p44, %p45
      %s48 = sadd.s32 %s47, 1
      %p51 = scmp.eq.s32.totalorder %s13, 1
      %p52 = scmp.ne.s32.totalorder %s47, %s49
      %p53 = scmp.eq.s32.totalorder %s13, 0
      %p54 = por %p52, %p53
      %p55 = scmp.ne.s32.totalorder %s47, %s49
      %p56 = scmp.eq.s32.totalorder %s18, 1
      %p57 = por %p55, %p56
      %p58 = scmp.ne.s32.totalorder %s49, %s50
      %p59 = scmp.eq.s32.totalorder %s18, 0
      %p60 = por %p58, %p59
      %p61 = scmp.ne.s32.totalorder %s49, %s50
      %p62 = scmp.eq.s32.totalorder %s19, 1
      %p63 = por %p61, %p62
      %p65 = scmp.ne.s32.totalorder %s50, %s64
      %p66 = scmp.eq.s32.totalorder %s19, 0
      %p67 = por %p65, %p66
      %s69 = sadd.s32 %s68, 1
      %p72 = scmp.eq.s32.totalorder %s13, 1
      %p73 = scmp.ne.s32.totalorder %s68, %s70
      %p74 = scmp.eq.s32.totalorder %s13, 0
      %p75 = por %p73, %p74
      %p76 = scmp.ne.s32.totalorder %s68, %s70
      %p77 = scmp.eq.s32.totalorder %s18, 1
      %p78 = por %p76, %p77
      %p79 = scmp.ne.s32.totalorder %s70, %s71
      %p80 = scmp.eq.s32.totalorder %s18, 0
      %p81 = por %p79, %p80
      %p82 = scmp.ne.s32.totalorder %s70, %s71
      %p83 = scmp.eq.s32.totalorder %s19, 1
      %p84 = por %p82, %p83
      %p86 = scmp.ne.s32.totalorder %s71, %s85
      %p87 = scmp.eq.s32.totalorder %s19, 0
      %p88 = por %p86, %p87
      %s90 = sadd.s32 %s89, 1
      %p93 = scmp.eq.s32.totalorder %s13, 1
      %p94 = scmp.ne.s32.totalorder %s89, %s91
      %p95 = scmp.eq.s32.totalorder %s13, 0
      %p96 = por %p94, %p95
      %p97 = scmp.ne.s32.totalorder %s89, %s91
      %p98 = scmp.eq.s32.totalorder %s18, 1
      %p99 = por %p97, %p98
      %p100 = scmp.ne.s32.totalorder %s91, %s92
      %p101 = scmp.eq.s32.totalorder %s18, 0
      %p102 = por %p100, %p101
      %p103 = scmp.ne.s32.totalorder %s91, %s92
      %p104 = scmp.eq.s32.totalorder %s19, 1
      %p105 = por %p103, %p104
      %p107 = scmp.ne.s32.totalorder %s92, %s106
      %p108 = scmp.eq.s32.totalorder %s19, 0
      %p109 = por %p107, %p108
      %s110 = ssub.s32 %s13, %s20
      %p111 = scmp.eq.s32.totalorder %s110, 0
      %s113 = sadd.s32 %s112, 1
      %s114 = scalar_select %p111, %s112, %s113
      %p117 = pneg %p111
      %p118 = scmp.eq.s32.totalorder %s13, 1
      %p119 = por %p117, %p118
      %p120 = scmp.ne.s32.totalorder %s112, %s115
      %p121 = scmp.eq.s32.totalorder %s13, 0
      %p122 = por %p120, %p121
      %p123 = scmp.ne.s32.totalorder %s112, %s115
      %p124 = scmp.eq.s32.totalorder %s18, 1
      %p125 = por %p123, %p124
      %p126 = scmp.ne.s32.totalorder %s115, %s116
      %p127 = scmp.eq.s32.totalorder %s18, 0
      %p128 = por %p126, %p127
      %p129 = scmp.ne.s32.totalorder %s115, %s116
      %p130 = scmp.eq.s32.totalorder %s19, 1
      %p131 = por %p129, %p130
      %p133 = scmp.ne.s32.totalorder %s116, %s132
      %p134 = scmp.eq.s32.totalorder %s19, 0
      %p135 = por %p133, %p134
      %p136 = scmp.le.s32.totalorder 1, %s13
      %p137 = scmp.lt.s32.totalorder %s13, 3
      %p138 = pnand %p136, %p137
      %p139 = pneg %p138
      // Predicated region
      $region9: #{_lyapunov_ellipse_impl.1} parent=5 // pred_check
        _
      $region10: #{_lyapunov_ellipse_impl.1} parent=5 // pred_check_branch
        %141 = sbr.rel (%p138) target = $region12
      $region11: #{_lyapunov_ellipse_impl.1} parent=5 // pred_region
        %s142 = ssub.s32 %s13, 1
        // Predicated region
        $region13: #{_lyapunov_ellipse_impl.1} parent=11 // pred_check
          %p143 = pneg %p60
        $region14: #{_lyapunov_ellipse_impl.1} parent=11 // pred_check_branch
          %145 = sbr.rel (%p143) target = $region16
        $region15: #{_lyapunov_ellipse_impl.1} parent=11 // pred_region
          _
        $region16: #{_lyapunov_ellipse_impl.1} parent=11 // pred_fallthru
          _
        // Predicated region
        $region17: #{_lyapunov_ellipse_impl.1} parent=11 // pred_check
          %p146 = pneg %p81
        $region18: #{_lyapunov_ellipse_impl.1} parent=11 // pred_check_branch
          %148 = sbr.rel (%p146) target = $region20
        $region19: #{_lyapunov_ellipse_impl.1} parent=11 // pred_region
          _
        $region20: #{_lyapunov_ellipse_impl.1} parent=11 // pred_fallthru
          _
        // Predicated region
        $region21: #{_lyapunov_ellipse_impl.1} parent=11 // pred_check
          %p149 = pneg %p102
        $region22: #{_lyapunov_ellipse_impl.1} parent=11 // pred_check_branch
          %151 = sbr.rel (%p149) target = $region24
        $region23: #{_lyapunov_ellipse_impl.1} parent=11 // pred_region
          _
        $region24: #{_lyapunov_ellipse_impl.1} parent=11 // pred_fallthru
          _
      $region12: #{_lyapunov_ellipse_impl.1} parent=5 // pred_fallthru
        _
      %p152 = scmp.lt.s32.totalorder %s13, 2
      // Predicated region
      $region25: #{_lyapunov_ellipse_impl.1} parent=5 // pred_check
        %p153 = pneg %p152
      $region26: #{_lyapunov_ellipse_impl.1} parent=5 // pred_check_branch
        %155 = sbr.rel (%p153) target = $region28
      $region27: #{_lyapunov_ellipse_impl.1} parent=5 // pred_region
        // Predicated region
        $region29: #{_lyapunov_ellipse_impl.1} parent=27 // pred_check
          %p156 = pneg %p33
        $region30: #{_lyapunov_ellipse_impl.1} parent=27 // pred_check_branch
          %158 = sbr.rel (%p156) target = $region32
        $region31: #{_lyapunov_ellipse_impl.1} parent=27 // pred_region
          %p159 = scmp.lt.s32.totalorder %s13, 1
          %s160 = scalar_select %p159, %s13, 1
          %s161 = smul.addr %s160, 2
          %s162 = scalar_lea.vmem %s0, %s161
        $region32: #{_lyapunov_ellipse_impl.1} parent=27 // pred_fallthru
          _
      $region28: #{_lyapunov_ellipse_impl.1} parent=5 // pred_fallthru
        _
      %p163 = scmp.le.s32.totalorder 1, %s13
      %p164 = scmp.lt.s32.totalorder %s13, 3
      %p165 = pnand %p163, %p164
      %p166 = pneg %p165
      // Predicated region
      $region33: #{_lyapunov_ellipse_impl.1} parent=5 // pred_check
        _
      $region34: #{_lyapunov_ellipse_impl.1} parent=5 // pred_check_branch
        %168 = sbr.rel (%p165) target = $region36
      $region35: #{_lyapunov_ellipse_impl.1} parent=5 // pred_region
        %s169 = ssub.s32 %s13, 1
        %p170 = scmp.lt.s32.totalorder %s18, 1
        %s171 = scalar_select %p170, %s18, 1
        %s172 = smul.addr %s171, 2
        %s173 = scalar_lea.vmem %s0, %s172
        %p174 = pneg %p39
        %p175 = pneg %p36
        %p176 = pneg %p60
        %p177 = pneg %p57
        %p178 = pneg %p81
        %p179 = pneg %p78
        %p180 = pneg %p102
        %p181 = pneg %p99
        %p182 = pneg %p128
        %p183 = pneg %p125
        %s184 = sand.u32 %s115, 1
        %s185 = scalar_lea.sflag [#allocation3], %s184
        %s186 = sand.u32 %s115, 1
        %s187 = scalar_lea.vmem [#allocation2], %s186
        %p188 = scmp.lt.s32.totalorder %s18, 1
        %s189 = scalar_select %p188, %s18, 1
        %s190 = smul.addr %s189, 2
        %s191 = scalar_lea.vmem %s0, %s190
        %v192 = vld [vmem:[%s191] sm:$0x3]
        %v193 = vld [vmem:[%s3] sm:$0xff]
        %v194 = vld [vmem:[%s3 + $0x8] sm:$0xff]
        %v195 = vld [vmem:[%s3 + $0x10] sm:$0xff]
        %v196 = vld [vmem:[%s3 + $0x18] sm:$0xff]
        %198 = vset.pattern.permute.xlu0 1
        %199 = vperm.xlu0 %198, %v193
        %v200 = vpop.permute.xlu0 %199
        %203 = vset.pattern.permute.xlu0 1
        %204 = vperm.xlu0 %203, %v194
        %v205 = vpop.permute.xlu0 %204
        %208 = vset.pattern.permute.xlu0 1
        %209 = vperm.xlu0 %208, %v195
        %v210 = vpop.permute.xlu0 %209
        %213 = vset.pattern.permute.xlu0 1
        %214 = vperm.xlu0 %213, %v196
        %v215 = vpop.permute.xlu0 %214
        %217 = vset.pattern.permute.xlu0 4
        %218 = vperm.xlu0 %217, %v193
        %v219 = vpop.permute.xlu0 %218
        %221 = vset.pattern.permute.xlu0 4
        %222 = vperm.xlu0 %221, %v194
        %v223 = vpop.permute.xlu0 %222
        %225 = vset.pattern.permute.xlu0 4
        %226 = vperm.xlu0 %225, %v195
        %v227 = vpop.permute.xlu0 %226
        %229 = vset.pattern.permute.xlu0 4
        %230 = vperm.xlu0 %229, %v196
        %v231 = vpop.permute.xlu0 %230
        %v233 = vlaneseq
        %v234 = vshrl.u32 %v233, 7
        %v235 = vsub.s32 0, %v234
        %v236 = vrot.slane %v192, %v235
        %v237 = vmul.f32 %v219, %v236
        %v238 = vmul.f32 %v223, %v236
        %v239 = vmul.f32 %v227, %v236
        %v240 = vmul.f32 %v231, %v236
        %v241 = vadd.f32 %v200, %v237
        %v242 = vadd.f32 %v205, %v238
        %v243 = vadd.f32 %v210, %v239
        %v244 = vadd.f32 %v215, %v240
        %245 = vset.pattern.permute.xlu0 5
        %246 = vperm.xlu0 %245, %v193
        %v247 = vpop.permute.xlu0 %246
        %249 = vset.pattern.permute.xlu0 5
        %250 = vperm.xlu0 %249, %v194
        %v251 = vpop.permute.xlu0 %250
        %253 = vset.pattern.permute.xlu0 5
        %254 = vperm.xlu0 %253, %v195
        %v255 = vpop.permute.xlu0 %254
        %257 = vset.pattern.permute.xlu0 5
        %258 = vperm.xlu0 %257, %v196
        %v259 = vpop.permute.xlu0 %258
        %v261 = vlaneseq
        %v262 = vshrl.u32 %v261, 7
        %v263 = vsub.s32 1, %v262
        %v264 = vrot.slane %v192, %v263
        %v265 = vmul.f32 %v247, %v264
        %v266 = vmul.f32 %v251, %v264
        %v267 = vmul.f32 %v255, %v264
        %v268 = vmul.f32 %v259, %v264
        %v269 = vadd.f32 %v241, %v265
        %v270 = vadd.f32 %v242, %v266
        %v271 = vadd.f32 %v243, %v267
        %v272 = vadd.f32 %v244, %v268
        %v273 = vtanh.pop %v269
        %v274 = vtanh.pop %v270
        %v275 = vtanh.pop %v271
        %v276 = vtanh.pop %v272
        %v277 = vld [vmem:[%s1] sm:$0xff]
        %v278 = vld [vmem:[%s1 + $0x8] sm:$0xff]
        %v279 = vld [vmem:[%s1 + $0x10] sm:$0xff]
        %v280 = vld [vmem:[%s1 + $0x18] sm:$0xff]
        %281 = vset.pattern.permute.xlu0 2
        %282 = vperm.xlu0 %281, %v193
        %v283 = vpop.permute.xlu0 %282
        %285 = vset.pattern.permute.xlu0 2
        %286 = vperm.xlu0 %285, %v194
        %v287 = vpop.permute.xlu0 %286
        %289 = vset.pattern.permute.xlu0 2
        %290 = vperm.xlu0 %289, %v195
        %v291 = vpop.permute.xlu0 %290
        %293 = vset.pattern.permute.xlu0 2
        %294 = vperm.xlu0 %293, %v196
        %v295 = vpop.permute.xlu0 %294
        %vm297 = vcmask 261120
        %v299 = vsel %vm297, %v277, 0
        %v302 = vsel %vm297, %v278, 0
        %v305 = vsel %vm297, %v279, 0
        %v308 = vsel %vm297, %v280, 0
        %310 = vmatprep.subr.mxu0 0.0
        %311 = vmatpush1.msra.mxu0 %v273
        %312 = vmatprep.subr.mxu0 0.0
        %313 = vmatpush1.msra.mxu0 %v274
        %314 = vmatprep.subr.mxu0 0.0
        %315 = vmatpush1.msra.mxu0 %v275
        %316 = vmatprep.subr.mxu0 0.0
        %317 = vmatpush1.msra.mxu0 %v276
        %318 = vmatprep.subr.mxu0 0.0
        %319 = vmatpush1.msra.mxu0 0.0
        %320 = vmatprep.subr.mxu0 0.0
        %321 = vmatpush1.msra.mxu0 0.0
        %322 = vmatprep.subr.mxu0 0.0
        %323 = vmatpush1.msra.mxu0 0.0
        %324 = vmatprep.subr.mxu0 0.0
        %325 = vmatpush1.msra.mxu0 0.0
        %326 = vmatprep.subr.mxu0 0.0
        %327 = vmatpush1.msra.mxu0 0.0
        %328 = vmatprep.subr.mxu0 0.0
        %329 = vmatpush1.msra.mxu0 0.0
        %330 = vmatprep.subr.mxu0 0.0
        %331 = vmatpush1.msra.mxu0 0.0
        %332 = vmatprep.subr.mxu0 0.0
        %333 = vmatpush1.msra.mxu0 0.0
        %334 = vmatprep.subr.mxu0 0.0
        %335 = vmatpush1.msra.mxu0 0.0
        %336 = vmatprep.subr.mxu0 0.0
        %337 = vmatpush1.msra.mxu0 0.0
        %338 = vmatprep.subr.mxu0 0.0
        %339 = vmatpush1.msra.mxu0 0.0
        %340 = vmatprep.subr.mxu0 0.0
        %341 = vmatpush1.msra.mxu0 0.0
        %342 = vmatprep.subr.mxu0 0.0
        %343 = vmatpush1.msra.mxu0 0.0
        %344 = vmatprep.subr.mxu0 0.0
        %345 = vmatpush1.msra.mxu0 0.0
        %346 = vmatprep.subr.mxu0 0.0
        %347 = vmatpush1.msra.mxu0 0.0
        %348 = vmatprep.subr.mxu0 0.0
        %349 = vmatpush1.msra.mxu0 0.0
        %350 = vmatprep.subr.mxu0 0.0
        %351 = vmatpush1.msra.mxu0 0.0
        %352 = vmatprep.subr.mxu0 0.0
        %353 = vmatpush1.msra.mxu0 0.0
        %354 = vmatprep.subr.mxu0 0.0
        %355 = vmatpush1.msra.mxu0 0.0
        %356 = vmatprep.subr.mxu0 0.0
        %357 = vmatpush1.msra.mxu0 0.0
        %358 = vmatprep.subr.mxu0 0.0
        %359 = vmatpush1.msra.mxu0 0.0
        %360 = vmatprep.subr.mxu0 0.0
        %361 = vmatpush1.msra.mxu0 0.0
        %362 = vmatprep.subr.mxu0 0.0
        %363 = vmatpush1.msra.mxu0 0.0
        %364 = vmatprep.subr.mxu0 0.0
        %365 = vmatpush1.msra.mxu0 0.0
        %366 = vmatprep.subr.mxu0 0.0
        %367 = vmatpush1.msra.mxu0 0.0
        %368 = vmatprep.subr.mxu0 0.0
        %369 = vmatpush1.msra.mxu0 0.0
        %370 = vmatprep.subr.mxu0 0.0
        %371 = vmatpush1.msra.mxu0 0.0
        %372 = vmatprep.subr.mxu0 0.0
        %373 = vmatpush1.msra.mxu0 0.0
        %374 = vmatprep.mubr.f32.mxu0 0.0
        %375 = vmatmul.mubr.f32.gmra.mrb[0].mxu0 %v299
        %v376 = vpop.f32.mrb[0].mxu0
        %v377 = vadd.f32 %v283, %v376
        %v378 = vpop.f32.mrb[0].mxu0
        %379 = vmatprep.mubr.f32.mxu0 0.0
        %380 = vmatmul.mubr.f32.gmra.mrb[0].mxu0 %v302
        %v381 = vpop.f32.mrb[0].mxu0
        %v382 = vadd.f32 %v287, %v381
        %v383 = vpop.f32.mrb[0].mxu0
        %384 = vmatprep.mubr.f32.mxu0 0.0
        %385 = vmatmul.mubr.f32.gmra.mrb[0].mxu0 %v305
        %v386 = vpop.f32.mrb[0].mxu0
        %v387 = vadd.f32 %v291, %v386
        %v388 = vpop.f32.mrb[0].mxu0
        %389 = vmatprep.mubr.f32.mxu0 0.0
        %390 = vmatmul.mubr.f32.gmra.mrb[0].mxu0 %v308
        %v391 = vpop.f32.mrb[0].mxu0
        %v392 = vadd.f32 %v295, %v391
        %v393 = vpop.f32.mrb[0].mxu0
        %394 = vdwg.mxu0
        %v395 = vtanh.pop %v377
        %v396 = vtanh.pop %v382
        %v397 = vtanh.pop %v387
        %v398 = vtanh.pop %v392
        %v399 = vld [vmem:[%s2] sm:$0xf]
        %400 = vset.pattern.permute.xlu0 3
        %401 = vperm.xlu0 %400, %v193
        %v402 = vpop.permute.xlu0 %401
        %v405 = vsel %vm297, %v399, 0
        %407 = vmatprep.subr.mxu0 0.0
        %408 = vmatpush1.msra.mxu0 %v395
        %409 = vmatprep.subr.mxu0 0.0
        %410 = vmatpush1.msra.mxu0 %v396
        %411 = vmatprep.subr.mxu0 0.0
        %412 = vmatpush1.msra.mxu0 %v397
        %413 = vmatprep.subr.mxu0 0.0
        %414 = vmatpush1.msra.mxu0 %v398
        %415 = vmatprep.subr.mxu0 0.0
        %416 = vmatpush1.msra.mxu0 0.0
        %417 = vmatprep.subr.mxu0 0.0
        %418 = vmatpush1.msra.mxu0 0.0
        %419 = vmatprep.subr.mxu0 0.0
        %420 = vmatpush1.msra.mxu0 0.0
        %421 = vmatprep.subr.mxu0 0.0
        %422 = vmatpush1.msra.mxu0 0.0
        %423 = vmatprep.subr.mxu0 0.0
        %424 = vmatpush1.msra.mxu0 0.0
        %425 = vmatprep.subr.mxu0 0.0
        %426 = vmatpush1.msra.mxu0 0.0
        %427 = vmatprep.subr.mxu0 0.0
        %428 = vmatpush1.msra.mxu0 0.0
        %429 = vmatprep.subr.mxu0 0.0
        %430 = vmatpush1.msra.mxu0 0.0
        %431 = vmatprep.subr.mxu0 0.0
        %432 = vmatpush1.msra.mxu0 0.0
        %433 = vmatprep.subr.mxu0 0.0
        %434 = vmatpush1.msra.mxu0 0.0
        %435 = vmatprep.subr.mxu0 0.0
        %436 = vmatpush1.msra.mxu0 0.0
        %437 = vmatprep.subr.mxu0 0.0
        %438 = vmatpush1.msra.mxu0 0.0
        %439 = vmatprep.subr.mxu0 0.0
        %440 = vmatpush1.msra.mxu0 0.0
        %441 = vmatprep.subr.mxu0 0.0
        %442 = vmatpush1.msra.mxu0 0.0
        %443 = vmatprep.subr.mxu0 0.0
        %444 = vmatpush1.msra.mxu0 0.0
        %445 = vmatprep.subr.mxu0 0.0
        %446 = vmatpush1.msra.mxu0 0.0
        %447 = vmatprep.subr.mxu0 0.0
        %448 = vmatpush1.msra.mxu0 0.0
        %449 = vmatprep.subr.mxu0 0.0
        %450 = vmatpush1.msra.mxu0 0.0
        %451 = vmatprep.subr.mxu0 0.0
        %452 = vmatpush1.msra.mxu0 0.0
        %453 = vmatprep.subr.mxu0 0.0
        %454 = vmatpush1.msra.mxu0 0.0
        %455 = vmatprep.subr.mxu0 0.0
        %456 = vmatpush1.msra.mxu0 0.0
        %457 = vmatprep.subr.mxu0 0.0
        %458 = vmatpush1.msra.mxu0 0.0
        %459 = vmatprep.subr.mxu0 0.0
        %460 = vmatpush1.msra.mxu0 0.0
        %461 = vmatprep.subr.mxu0 0.0
        %462 = vmatpush1.msra.mxu0 0.0
        %463 = vmatprep.subr.mxu0 0.0
        %464 = vmatpush1.msra.mxu0 0.0
        %465 = vmatprep.subr.mxu0 0.0
        %466 = vmatpush1.msra.mxu0 0.0
        %467 = vmatprep.subr.mxu0 0.0
        %468 = vmatpush1.msra.mxu0 0.0
        %469 = vmatprep.subr.mxu0 0.0
        %470 = vmatpush1.msra.mxu0 0.0
        %471 = vmatprep.mubr.f32.mxu0 0.0
        %472 = vmatmul.mubr.f32.gmra.mrb[0].mxu0 %v405
        %v473 = vpop.f32.mrb[0].mxu0
        %v474 = vadd.f32 %v402, %v473
        %v475 = vpop.f32.mrb[0].mxu0
        %476 = vdwg.mxu0
        %477 = vset.pattern.permute.xlu0 0
        %478 = vperm.xlu0 %477, %v193
        %v479 = vpop.permute.xlu0 %478
        %v481 = vsub.f32 %v192, %v479
        %v482 = vmul.f32 %v481, %v481
        %vm483 = vcmask 1041408
        %v484 = vsel %vm483, %v482, 0.0
        %v485 = vrot.slane %v484, 4
        %v486 = vadd.f32 %v484, %v485
        %v487 = vrot.slane %v486, 2
        %v488 = vadd.f32 %v486, %v487
        %v489 = vrot.slane %v488, 1
        %v490 = vadd.f32 %v488, %v489
        %v491 = vmul.f32 %v474, %v481
        %v492 = vadd.f32 %v491, 0.0
        %v494 = vrot.slane %v481, 7
        %v496 = vmul.f32 %v474, %v494
        %v498 = vrot.slane %v496, 2
        %v500 = vadd.f32 %v492, %v498
        %v501 = vmul.f32 %v500, %v500
        %v502 = vadd.f32 %v490, %v501
        %v503 = vadd.f32 %v496, 0.0
        %v504 = vrot.slane %v481, 6
        %v506 = vmul.f32 %v474, %v504
        %v508 = vrot.slane %v506, 2
        %v510 = vadd.f32 %v503, %v508
        %v511 = vmul.f32 %v510, %v510
        %v513 = vrot.slane %v511, 1
        %v515 = vadd.f32 %v502, %v513
        %516 = vst [vmem:[%s187] sm:$0x1] %v515
        %s517 = sand.u32 %s115, 1
        %s518 = scalar_lea.sflag [#allocation3], %s517
        %s519 = sand.u32 %s115, 1
        %s520 = scalar_lea.vmem [#allocation2], %s519
        // Predicated region
        $region37: #{_lyapunov_ellipse_impl.1} parent=35 // pred_check
          %p521 = pneg %p125
        $region38: #{_lyapunov_ellipse_impl.1} parent=35 // pred_check_branch
          %523 = sbr.rel (%p521) target = $region40
        $region39: #{_lyapunov_ellipse_impl.1} parent=35 // pred_region
          %s525 = ssub.s32 16, 16
          %526 = vsyncadd %s518, %s525
          %s527 = smul.addr %s18, 16
          %s528 = scalar_lea.hbm %s4, %s527
          %s530 = sshll.u32 %s520, 4
          %s531 = int_to_ptr.vmem [resolvable:$true] %s530
          %533 = dma.vmem_to_hbm [thread:$0]  %s531, 16, %s528, %s518
        $region40: #{_lyapunov_ellipse_impl.1} parent=35 // pred_fallthru
          _
      $region36: #{_lyapunov_ellipse_impl.1} parent=5 // pred_fallthru
        _
      %p534 = scmp.le.s32.totalorder 2, %s13
      // Predicated region
      $region41: #{_lyapunov_ellipse_impl.1} parent=5 // pred_check
        %p535 = pneg %p534
      $region42: #{_lyapunov_ellipse_impl.1} parent=5 // pred_check_branch
        %537 = sbr.rel (%p535) target = $region44
      $region43: #{_lyapunov_ellipse_impl.1} parent=5 // pred_region
        %s538 = ssub.s32 %s13, 2
        // Predicated region
        $region45: #{_lyapunov_ellipse_impl.1} parent=43 // pred_check
          %p539 = pneg %p131
        $region46: #{_lyapunov_ellipse_impl.1} parent=43 // pred_check_branch
          %541 = sbr.rel (%p539) target = $region48
        $region47: #{_lyapunov_ellipse_impl.1} parent=43 // pred_region
          %s542 = sand.u32 %s116, 1
          %s543 = scalar_lea.sflag [#allocation3], %s542
          %s544 = sand.u32 %s116, 1
          %s545 = scalar_lea.vmem [#allocation2], %s544
          %546 = dma.done %s543, 16
        $region48: #{_lyapunov_ellipse_impl.1} parent=43 // pred_fallthru
          _
      $region44: #{_lyapunov_ellipse_impl.1} parent=5 // pred_fallthru
        _
    $region6: #{_lyapunov_ellipse_impl.1} parent=1 // loop_footer
      %s17 = sadd.s32 1, %s13
    $region7: #{_lyapunov_ellipse_impl.1} parent=1 // loop_footer_branch
      %12 = sbr.rel target = $region3
    $region8: #{_lyapunov_ellipse_impl.1} parent=1 // loop_exit
      _
    %547 = vsyncpa [#allocation3], 1
    %s548 = scalar_lea.sflag [#allocation3], 1
    %549 = vsyncpa %s548, 1

</llo_original>
